<compile_context>
chip_gen: v6e
topology: v6e:2x2x1
jax: 0.10.0
libtpu: 0.0.40
codegen_flags: <defaults>
</compile_context>

<pallas_src>
import jax
import jax.numpy as jnp
from jax.experimental import pallas as pl
from jax.experimental.pallas import tpu as pltpu

_MAX_TILE_B = 512        # amortize ~0.35us/step grid overhead
_MIN_TILE_B = 128        # output lane width -> unmasked stores
_MAX_ONEHOT_ROWS = 2048  # one-hot gather cost scales with table rows
_ISSUE_UNROLL = 8        # manual unroll of the DMA-descriptor issue loop


def _pick_tile_b(batch):
    """Largest tile (<=512, multiple of 128) that still leaves >=2 grid steps
    so both v7x TensorCores get work under dimension_semantics=('parallel',)."""
    tile = _MAX_TILE_B
    while tile > _MIN_TILE_B and pl.cdiv(batch, tile) < 2:
        tile //= 2
    return tile


def _vmem_table_budget_bytes():
    """Generation-aware budget for keeping both tables VMEM-resident.

    ~1/4 of physical VMEM leaves headroom for pipeline buffers and the one-hot
    temporaries (v7x: 64 MiB -> ~16 MiB of tables; v5e/v6e: 128 MiB -> 32 MiB).
    """
    try:
        cap = pltpu.get_tpu_info().vmem_capacity_bytes
    except Exception:  # not resolvable at trace time -> conservative default
        cap = 64 * 1024 * 1024
    return max(cap // 4, 8 * 1024 * 1024)


# ---------------------------------------------------------------------------
# Fast path: VMEM-resident tables, one-hot gather on the MXU.
# ---------------------------------------------------------------------------
def _mfact_vmem_kernel(users_ref, movies_ref, z_ref, w_ref, out_ref):
    # users_ref/movies_ref: (1, TILE_B) int32 VMEM blocks
    # z_ref: (nb_users, rank), w_ref: (nb_movies, rank) -- whole tables in VMEM
    tb = users_ref.shape[1]
    nbu = z_ref.shape[0]
    nbm = w_ref.shape[0]

    u = users_ref[...]   # (1, tb)
    m = movies_ref[...]  # (1, tb)

    # One-hot gather; batch stays on the lane axis throughout.
    u_oh = (jax.lax.broadcasted_iota(jnp.int32, (nbu, tb), 0) == u).astype(jnp.float32)
    m_oh = (jax.lax.broadcasted_iota(jnp.int32, (nbm, tb), 0) == m).astype(jnp.float32)

    # Z^T @ onehot_u -> (rank, tb); W^T @ onehot_m -> (rank, tb)   (MXU)
    zt = jax.lax.dot_general(z_ref[...].astype(jnp.float32), u_oh,
                             dimension_numbers=(((0,), (0,)), ((), ())),
                             preferred_element_type=jnp.float32)
    wt = jax.lax.dot_general(w_ref[...].astype(jnp.float32), m_oh,
                             dimension_numbers=(((0,), (0,)), ((), ())),
                             preferred_element_type=jnp.float32)

    # Elementwise product (VPU) + sublane reduction over rank -> (1, tb).
    out_ref[...] = jnp.sum(zt * wt, axis=0, keepdims=True)


def _mfact_vmem_call(users_p, movies_p, Z, W, tile_b, num_tiles, b_pad):
    nb_users, rank = Z.shape
    nb_movies = W.shape[0]
    cost = pl.CostEstimate(
        flops=2 * b_pad * rank * (nb_users + nb_movies) + 2 * b_pad * rank,
        transcendentals=0,
        bytes_accessed=(Z.size * Z.dtype.itemsize + W.size * W.dtype.itemsize
                        + 2 * b_pad * 4 + b_pad * 4),
    )
    return pl.pallas_call(
        _mfact_vmem_kernel,
        out_shape=jax.ShapeDtypeStruct((1, b_pad), jnp.float32),
        grid_spec=pl.GridSpec(
            grid=(num_tiles,),
            in_specs=[
                pl.BlockSpec((1, tile_b), lambda i: (0, i)),        # user ids
                pl.BlockSpec((1, tile_b), lambda i: (0, i)),        # movie ids
                pl.BlockSpec((nb_users, rank), lambda i: (0, 0)),   # Z resident
                pl.BlockSpec((nb_movies, rank), lambda i: (0, 0)),  # W resident
            ],
            out_specs=pl.BlockSpec((1, tile_b), lambda i: (0, i)),
        ),
        compiler_params=pltpu.CompilerParams(dimension_semantics=("parallel",)),
        cost_estimate=cost,
    )(users_p.reshape(1, b_pad), movies_p.reshape(1, b_pad), Z, W)


# ---------------------------------------------------------------------------
# Fallback path: HBM-resident tables, per-row DMA gather, bulk semaphore wait.
# ---------------------------------------------------------------------------
def _mfact_hbm_kernel(users_ref, movies_ref,   # scalar-prefetch (SMEM), (B_pad,) int32
                      z_hbm, w_hbm,            # HBM-resident tables (pl.ANY)
                      out_ref,                 # (1, TILE_B) f32 VMEM block
                      z_buf, w_buf,            # (TILE_B, rank) VMEM scratch
                      sems):                   # (2,) DMA semaphores
    tb = z_buf.shape[0]
    base = pl.multiple_of(pl.program_id(0) * tb, tb)

    # Issue one small row-DMA per lookup.  All Z-row copies share sems[0] and
    # all W-row copies share sems[1].  Manual 8x unroll lets the scheduler
    # co-issue SMEM index loads with descriptor pushes instead of paying
    # scalar-loop overhead per row.
    @pl.loop(0, tb // _ISSUE_UNROLL)
    def _issue(j):
        j0 = pl.multiple_of(j * _ISSUE_UNROLL, _ISSUE_UNROLL)
        for k in range(_ISSUE_UNROLL):
            i = j0 + k
            pltpu.make_async_copy(z_hbm.at[users_ref[base + i]],
                                  z_buf.at[i], sems.at[0]).start()
            pltpu.make_async_copy(w_hbm.at[movies_ref[base + i]],
                                  w_buf.at[i], sems.at[1]).start()

    # One bulk wait per table: DMA semaphores are byte-counted, so a single
    # descriptor whose size equals the whole scratch buffer drains exactly the
    # bytes issued by the tb equal-sized row copies above (the per-row wait
    # loop with its 2*tb serial semaphore waits is gone).
    pltpu.make_async_copy(z_buf, z_buf, sems.at[0]).wait()
    pltpu.make_async_copy(w_buf, w_buf, sems.at[1]).wait()

    # Elementwise product on the VPU (f32 accumulate, also correct for bf16 tables).
    prod = z_buf[...].astype(jnp.float32) * w_buf[...].astype(jnp.float32)   # (tb, R)

    # Rank reduction as ones(1,R) contracted with prod over R on the MXU:
    # directly produces the lane-dense (1, tb) output row (unmasked stores).
    ones_row = jnp.ones((1, prod.shape[1]), dtype=jnp.float32)
    out_ref[...] = jax.lax.dot_general(
        ones_row, prod,
        dimension_numbers=(((1,), (1,)), ((), ())),
        preferred_element_type=jnp.float32)


def _mfact_hbm_call(users_p, movies_p, Z, W, tile_b, num_tiles, b_pad):
    _, rank = Z.shape
    bytes_gathered = b_pad * rank * (Z.dtype.itemsize + W.dtype.itemsize)
    cost = pl.CostEstimate(
        flops=2 * b_pad * rank,
        transcendentals=0,
        bytes_accessed=bytes_gathered + 2 * b_pad * 4 + b_pad * 4,
    )
    grid_spec = pltpu.PrefetchScalarGridSpec(
        num_scalar_prefetch=2,                    # users, movies -> SMEM
        grid=(num_tiles,),
        in_specs=[
            pl.BlockSpec(memory_space=pl.ANY),    # Z stays in HBM; rows DMA'd on demand
            pl.BlockSpec(memory_space=pl.ANY),    # W stays in HBM
        ],
        out_specs=pl.BlockSpec((1, tile_b), lambda i, u, m: (0, i)),
        scratch_shapes=[
            pltpu.VMEM((tile_b, rank), Z.dtype),
            pltpu.VMEM((tile_b, rank), W.dtype),
            pltpu.SemaphoreType.DMA((2,)),
        ],
    )
    return pl.pallas_call(
        _mfact_hbm_kernel,
        out_shape=jax.ShapeDtypeStruct((1, b_pad), jnp.float32),
        grid_spec=grid_spec,
        compiler_params=pltpu.CompilerParams(dimension_semantics=("parallel",)),
        cost_estimate=cost,
    )(users_p, movies_p, Z, W)


# ---------------------------------------------------------------------------
# Public wrapper (forward of the torch MFact module).
# ---------------------------------------------------------------------------
def mfact_forward(users, movies, Z, W, *, force_path=None):
    """users, movies: (B,) ids; Z: (nb_users, rank); W: (nb_movies, rank).

    force_path: None (auto), "vmem" (resident-table one-hot gather) or
    "hbm" (per-row DMA gather from HBM)."""
    B = users.shape[0]
    nb_users, rank = Z.shape
    nb_movies, rank_w = W.shape
    assert rank == rank_w

    tile_b = _pick_tile_b(B)
    num_tiles = pl.cdiv(B, tile_b)
    b_pad = num_tiles * tile_b

    # Clamp (torch's nn.Embedding would raise on OOB; here we must avoid an
    # out-of-range gather) and pad the batch to the tile grid with index 0.
    users_i = jnp.clip(users.astype(jnp.int32), 0, nb_users - 1)
    movies_i = jnp.clip(movies.astype(jnp.int32), 0, nb_movies - 1)
    users_p = jnp.zeros((b_pad,), jnp.int32).at[:B].set(users_i)
    movies_p = jnp.zeros((b_pad,), jnp.int32).at[:B].set(movies_i)

    table_bytes = Z.size * Z.dtype.itemsize + W.size * W.dtype.itemsize
    use_vmem = (table_bytes <= _vmem_table_budget_bytes()
                and max(nb_users, nb_movies) <= _MAX_ONEHOT_ROWS)
    if force_path == "vmem":
        use_vmem = True
    elif force_path == "hbm":
        use_vmem = False

    if use_vmem:
        out = _mfact_vmem_call(users_p, movies_p, Z, W, tile_b, num_tiles, b_pad)
    else:
        out = _mfact_hbm_call(users_p, movies_p, Z, W, tile_b, num_tiles, b_pad)
    return out[0, :B]


if __name__ == "__main__":
    # Batch is NOT a multiple of the 128-wide tile (padding path exercised)
    # and the grid has 2 parallel tiles.  Tables are tiny -> auto path is the
    # VMEM-resident one; the HBM DMA-gather path is also exercised explicitly.
    nb_users, nb_movies, rank = 96, 160, 32
    batch = 200

    key = jax.random.PRNGKey(0)
    kz, kw, ku, km = jax.random.split(key, 4)

    Z = jax.random.normal(kz, (nb_users, rank), dtype=jnp.float32)   # self.Z.weight
    W = jax.random.normal(kw, (nb_movies, rank), dtype=jnp.float32)  # self.W.weight
    users = jax.random.randint(ku, (batch,), 0, nb_users, dtype=jnp.int32)
    movies = jax.random.randint(km, (batch,), 0, nb_movies, dtype=jnp.int32)

    # Pure-JAX reference of the torch forward.
    ref = jnp.sum(Z[users] * W[movies], axis=1)

    out_fast = jax.block_until_ready(mfact_forward(users, movies, Z, W))
    out_hbm = jax.block_until_ready(mfact_forward(users, movies, Z, W, force_path="hbm"))

    assert out_fast.shape == (batch,)
    assert out_hbm.shape == (batch,)
    assert jnp.allclose(out_fast, ref, atol=1e-4, rtol=1e-4), (out_fast, ref)
    assert jnp.allclose(out_hbm, ref, atol=1e-4, rtol=1e-4), (out_hbm, ref)

    print("KERNEL_OK")
</pallas_src>

<mosaic_0001>
module attributes {stable_mosaic.version = 11 : i64} {
  func.func @_mfact_vmem_kernel(%arg0: i32, %arg1: memref<1x128xi32, #tpu.memory_space<vmem>>, %arg2: memref<1x128xi32, #tpu.memory_space<vmem>>, %arg3: memref<96x32xf32, #tpu.memory_space<vmem>>, %arg4: memref<160x32xf32, #tpu.memory_space<vmem>>, %arg5: memref<1x128xf32, #tpu.memory_space<vmem>>) attributes {dimension_semantics = [#tpu.dimension_semantics<parallel>], iteration_bounds = array<i64: 2>, scalar_prefetch = 0 : i64, scratch_operands = 0 : i64, tpu.core_type = #tpu.core_type<tc>, window_params = [{transform_indices = @transform_0, window_bounds = array<i64: 1, 128>}, {transform_indices = @transform_1, window_bounds = array<i64: 1, 128>}, {pipeline_mode = #tpu.pipeline_mode<synchronous>, transform_indices = @transform_2, window_bounds = array<i64: 96, 32>}, {pipeline_mode = #tpu.pipeline_mode<synchronous>, transform_indices = @transform_3, window_bounds = array<i64: 160, 32>}, {transform_indices = @transform_4, window_bounds = array<i64: 1, 128>}]} {
    %c0 = arith.constant 0 : index
    %c0_0 = arith.constant 0 : index
    %0 = vector.load %arg1[%c0, %c0_0] : memref<1x128xi32, #tpu.memory_space<vmem>>, vector<1x128xi32>
    %c0_1 = arith.constant 0 : index
    %c0_2 = arith.constant 0 : index
    %1 = vector.load %arg2[%c0_1, %c0_2] : memref<1x128xi32, #tpu.memory_space<vmem>>, vector<1x128xi32>
    %2 = tpu.iota {dimensions = array<i32: 0>} : vector<96x128xi32>
    %3 = vector.broadcast %0 : vector<1x128xi32> to vector<96x128xi32>
    %4 = arith.cmpi eq, %2, %3 : vector<96x128xi32>
    %5 = arith.extui %4 : vector<96x128xi1> to vector<96x128xi32>
    %6 = arith.sitofp %5 : vector<96x128xi32> to vector<96x128xf32>
    %7 = tpu.iota {dimensions = array<i32: 0>} : vector<160x128xi32>
    %8 = vector.broadcast %1 : vector<1x128xi32> to vector<160x128xi32>
    %9 = arith.cmpi eq, %7, %8 : vector<160x128xi32>
    %10 = arith.extui %9 : vector<160x128xi1> to vector<160x128xi32>
    %11 = arith.sitofp %10 : vector<160x128xi32> to vector<160x128xf32>
    %c0_3 = arith.constant 0 : index
    %c0_4 = arith.constant 0 : index
    %12 = vector.load %arg3[%c0_3, %c0_4] : memref<96x32xf32, #tpu.memory_space<vmem>>, vector<96x32xf32>
    %cst = arith.constant dense<0.000000e+00> : vector<32x128xf32>
    %13 = tpu.matmul %12, %6, %cst {dimension_numbers = #tpu.dot_dimension_numbers<[0], [0], [1], [1], [0, 1, 1, 1], [], []>} : vector<96x32xf32>, vector<96x128xf32>, vector<32x128xf32> -> vector<32x128xf32>
    %c0_5 = arith.constant 0 : index
    %c0_6 = arith.constant 0 : index
    %14 = vector.load %arg4[%c0_5, %c0_6] : memref<160x32xf32, #tpu.memory_space<vmem>>, vector<160x32xf32>
    %cst_7 = arith.constant dense<0.000000e+00> : vector<32x128xf32>
    %15 = tpu.matmul %14, %11, %cst_7 {dimension_numbers = #tpu.dot_dimension_numbers<[0], [0], [1], [1], [0, 1, 1, 1], [], []>} : vector<160x32xf32>, vector<160x128xf32>, vector<32x128xf32> -> vector<32x128xf32>
    %16 = arith.mulf %13, %15 : vector<32x128xf32>
    %cst_8 = arith.constant dense<0.000000e+00> : vector<128xf32>
    %17 = vector.multi_reduction <add>, %16, %cst_8 [0] : vector<32x128xf32> to vector<128xf32>
    %18 = vector.shape_cast %17 : vector<128xf32> to vector<1x128xf32>
    %c0_9 = arith.constant 0 : index
    %c0_10 = arith.constant 0 : index
    %19 = vector.load %arg5[%c0_9, %c0_10] : memref<1x128xf32, #tpu.memory_space<vmem>>, vector<1x128xf32>
    tpu.vector_store %arg5[%c0_9, %c0_10], %18 {strides = array<i32>} : memref<1x128xf32, #tpu.memory_space<vmem>>, vector<1x128xf32>,
    return
  }
  func.func @transform_0(%arg0: i32) -> (i32, i32) {
    %c0_i32 = arith.constant 0 : i32
    %c0_i32_0 = arith.constant 0 : i32
    return %c0_i32, %arg0 : i32, i32
  }
  func.func @transform_1(%arg0: i32) -> (i32, i32) {
    %c0_i32 = arith.constant 0 : i32
    %c0_i32_0 = arith.constant 0 : i32
    return %c0_i32, %arg0 : i32, i32
  }
  func.func @transform_2(%arg0: i32) -> (i32, i32) {
    %c0_i32 = arith.constant 0 : i32
    %c0_i32_0 = arith.constant 0 : i32
    %c0_i32_1 = arith.constant 0 : i32
    return %c0_i32, %c0_i32_0 : i32, i32
  }
  func.func @transform_3(%arg0: i32) -> (i32, i32) {
    %c0_i32 = arith.constant 0 : i32
    %c0_i32_0 = arith.constant 0 : i32
    %c0_i32_1 = arith.constant 0 : i32
    return %c0_i32, %c0_i32_0 : i32, i32
  }
  func.func @transform_4(%arg0: i32) -> (i32, i32) {
    %c0_i32 = arith.constant 0 : i32
    %c0_i32_0 = arith.constant 0 : i32
    return %c0_i32, %arg0 : i32, i32
  }
}

</mosaic_0001>

<llo_original>
// kernel: tpu_custom_call.1
$region0: #{tpu_custom_call.1}
  #allocation0 [shape = 'u32[]', space=smem, size = 0x4, offset = 0x4, fixed_abs, tag = 'smem constant byte address 0x4 - core index']
  #allocation1 [shape = 'u32[144,128]{1,0:T(1,128)}', space=vmem, size = 0x12000, scoped, tag = 'internal scratch']
  %s0 = inlined_call_operand.vmem [shape: s32[1,256], index: 0, kind: input, shape index: {}]
  %s1 = inlined_call_operand.vmem [shape: s32[1,256], index: 1, kind: input, shape index: {}]
  %s2 = inlined_call_operand.vmem [shape: f32[96,32], index: 2, kind: input, shape index: {}]
  %s3 = inlined_call_operand.vmem [shape: f32[160,32], index: 3, kind: input, shape index: {}]
  %s4 = inlined_call_operand.hbm [shape: f32[1,256], index: 4, kind: output, shape index: {}]
  %s5 = sld [smem:[#allocation0]]
  $region49: #{tpu_custom_call.1} parent=0
    _
  %s7 = ssub.s32 1, %s5
  %s8 = scalar_select 0, %s7, %s5
  $region1: #{tpu_custom_call.1} parent=0
    #allocation2 [shape = 'u8[1024]{0}', space=vmem, size = 0x400, scoped, tag = 'output window, operand 0']
    #allocation3 [shape = 's32[2]{0}', space=sflag, size = 0x8, scoped, tag = 'scoped memory for tpu_custom_call.1']
    %9 = vsyncpa [#allocation3], 0
    %s10 = scalar_lea.sflag [#allocation3], 1
    %11 = vsyncpa %s10, 0
    loop: start=0, step=1, limit=4
    $region2: #{tpu_custom_call.1} parent=1 // loop_pre_header
      _
    $region3: #{tpu_custom_call.1} parent=1 // loop_header
      %s13 = sphi 0, %s17
      %p14 = scmp.ge.s32.totalorder %s13, 4
      %s23 = sphi 0, %s25
      %s26 = sphi 0, %s23
      %s27 = sphi 0, %s26
      %s43 = sphi 0, %s27
      %s49 = sphi 0, %s51
      %s52 = sphi 0, %s49
      %s53 = sphi 0, %s52
      %s69 = sphi 0, %s53
      %s73 = sphi 0, %s73
      %s75 = sphi 0, %s73
      %s76 = sphi 0, %s75
      %s90 = sphi 0, %s76
      %s94 = sphi 0, %s94
      %s96 = sphi 0, %s94
      %s97 = sphi 0, %s96
      %s111 = sphi 0, %s97
      %s117 = sphi 0, %s119
      %s120 = sphi 0, %s117
      %s121 = sphi 0, %s120
      %s137 = sphi 0, %s121
    $region4: #{tpu_custom_call.1} parent=1 // loop_header_branch
      %16 = sbr.rel (%p14) target = $region8
    $region5: #{tpu_custom_call.1} parent=1 // loop_body
      %s18 = ssub.s32 %s13, 1
      %s19 = ssub.s32 %s13, 2
      %s20 = sadd.s32 %s13, 1
      %s21 = ssub.s32 %s13, %s20
      %p22 = scmp.eq.s32.totalorder %s21, 0
      %s24 = sadd.s32 %s23, 1
      %s25 = scalar_select %p22, %s23, %s24
      %p28 = pneg %p22
      %p29 = scmp.eq.s32.totalorder %s13, 1
      %p30 = por %p28, %p29
      %p31 = scmp.ne.s32.totalorder %s23, %s26
      %p32 = scmp.eq.s32.totalorder %s13, 0
      %p33 = por %p31, %p32
      %p34 = scmp.ne.s32.totalorder %s23, %s26
      %p35 = scmp.eq.s32.totalorder %s18, 1
      %p36 = por %p34, %p35
      %p37 = scmp.ne.s32.totalorder %s26, %s27
      %p38 = scmp.eq.s32.totalorder %s18, 0
      %p39 = por %p37, %p38
      %p40 = scmp.ne.s32.totalorder %s26, %s27
      %p41 = scmp.eq.s32.totalorder %s19, 1
      %p42 = por %p40, %p41
      %p44 = scmp.ne.s32.totalorder %s27, %s43
      %p45 = scmp.eq.s32.totalorder %s19, 0
      %p46 = por %p44, %p45
      %s47 = ssub.s32 %s13, %s20
      %p48 = scmp.eq.s32.totalorder %s47, 0
      %s50 = sadd.s32 %s49, 1
      %s51 = scalar_select %p48, %s49, %s50
      %p54 = pneg %p48
      %p55 = scmp.eq.s32.totalorder %s13, 1
      %p56 = por %p54, %p55
      %p57 = scmp.ne.s32.totalorder %s49, %s52
      %p58 = scmp.eq.s32.totalorder %s13, 0
      %p59 = por %p57, %p58
      %p60 = scmp.ne.s32.totalorder %s49, %s52
      %p61 = scmp.eq.s32.totalorder %s18, 1
      %p62 = por %p60, %p61
      %p63 = scmp.ne.s32.totalorder %s52, %s53
      %p64 = scmp.eq.s32.totalorder %s18, 0
      %p65 = por %p63, %p64
      %p66 = scmp.ne.s32.totalorder %s52, %s53
      %p67 = scmp.eq.s32.totalorder %s19, 1
      %p68 = por %p66, %p67
      %p70 = scmp.ne.s32.totalorder %s53, %s69
      %p71 = scmp.eq.s32.totalorder %s19, 0
      %p72 = por %p70, %p71
      %s74 = sadd.s32 %s73, 1
      %p77 = scmp.eq.s32.totalorder %s13, 1
      %p78 = scmp.ne.s32.totalorder %s73, %s75
      %p79 = scmp.eq.s32.totalorder %s13, 0
      %p80 = por %p78, %p79
      %p81 = scmp.ne.s32.totalorder %s73, %s75
      %p82 = scmp.eq.s32.totalorder %s18, 1
      %p83 = por %p81, %p82
      %p84 = scmp.ne.s32.totalorder %s75, %s76
      %p85 = scmp.eq.s32.totalorder %s18, 0
      %p86 = por %p84, %p85
      %p87 = scmp.ne.s32.totalorder %s75, %s76
      %p88 = scmp.eq.s32.totalorder %s19, 1
      %p89 = por %p87, %p88
      %p91 = scmp.ne.s32.totalorder %s76, %s90
      %p92 = scmp.eq.s32.totalorder %s19, 0
      %p93 = por %p91, %p92
      %s95 = sadd.s32 %s94, 1
      %p98 = scmp.eq.s32.totalorder %s13, 1
      %p99 = scmp.ne.s32.totalorder %s94, %s96
      %p100 = scmp.eq.s32.totalorder %s13, 0
      %p101 = por %p99, %p100
      %p102 = scmp.ne.s32.totalorder %s94, %s96
      %p103 = scmp.eq.s32.totalorder %s18, 1
      %p104 = por %p102, %p103
      %p105 = scmp.ne.s32.totalorder %s96, %s97
      %p106 = scmp.eq.s32.totalorder %s18, 0
      %p107 = por %p105, %p106
      %p108 = scmp.ne.s32.totalorder %s96, %s97
      %p109 = scmp.eq.s32.totalorder %s19, 1
      %p110 = por %p108, %p109
      %p112 = scmp.ne.s32.totalorder %s97, %s111
      %p113 = scmp.eq.s32.totalorder %s19, 0
      %p114 = por %p112, %p113
      %s115 = ssub.s32 %s13, %s20
      %p116 = scmp.eq.s32.totalorder %s115, 0
      %s118 = sadd.s32 %s117, 1
      %s119 = scalar_select %p116, %s117, %s118
      %p122 = pneg %p116
      %p123 = scmp.eq.s32.totalorder %s13, 1
      %p124 = por %p122, %p123
      %p125 = scmp.ne.s32.totalorder %s117, %s120
      %p126 = scmp.eq.s32.totalorder %s13, 0
      %p127 = por %p125, %p126
      %p128 = scmp.ne.s32.totalorder %s117, %s120
      %p129 = scmp.eq.s32.totalorder %s18, 1
      %p130 = por %p128, %p129
      %p131 = scmp.ne.s32.totalorder %s120, %s121
      %p132 = scmp.eq.s32.totalorder %s18, 0
      %p133 = por %p131, %p132
      %p134 = scmp.ne.s32.totalorder %s120, %s121
      %p135 = scmp.eq.s32.totalorder %s19, 1
      %p136 = por %p134, %p135
      %p138 = scmp.ne.s32.totalorder %s121, %s137
      %p139 = scmp.eq.s32.totalorder %s19, 0
      %p140 = por %p138, %p139
      %p141 = scmp.le.s32.totalorder 1, %s13
      %p142 = scmp.lt.s32.totalorder %s13, 3
      %p143 = pnand %p141, %p142
      %p144 = pneg %p143
      // Predicated region
      $region9: #{tpu_custom_call.1} parent=5 // pred_check
        _
      $region10: #{tpu_custom_call.1} parent=5 // pred_check_branch
        %146 = sbr.rel (%p143) target = $region12
      $region11: #{tpu_custom_call.1} parent=5 // pred_region
        %s147 = ssub.s32 %s13, 1
        // Predicated region
        $region13: #{tpu_custom_call.1} parent=11 // pred_check
          %p148 = pneg %p86
        $region14: #{tpu_custom_call.1} parent=11 // pred_check_branch
          %150 = sbr.rel (%p148) target = $region16
        $region15: #{tpu_custom_call.1} parent=11 // pred_region
          _
        $region16: #{tpu_custom_call.1} parent=11 // pred_fallthru
          _
        // Predicated region
        $region17: #{tpu_custom_call.1} parent=11 // pred_check
          %p151 = pneg %p107
        $region18: #{tpu_custom_call.1} parent=11 // pred_check_branch
          %153 = sbr.rel (%p151) target = $region20
        $region19: #{tpu_custom_call.1} parent=11 // pred_region
          _
        $region20: #{tpu_custom_call.1} parent=11 // pred_fallthru
          _
      $region12: #{tpu_custom_call.1} parent=5 // pred_fallthru
        _
      %p154 = scmp.lt.s32.totalorder %s13, 2
      // Predicated region
      $region21: #{tpu_custom_call.1} parent=5 // pred_check
        %p155 = pneg %p154
      $region22: #{tpu_custom_call.1} parent=5 // pred_check_branch
        %157 = sbr.rel (%p155) target = $region24
      $region23: #{tpu_custom_call.1} parent=5 // pred_region
        // Predicated region
        $region25: #{tpu_custom_call.1} parent=23 // pred_check
          %p158 = pneg %p33
        $region26: #{tpu_custom_call.1} parent=23 // pred_check_branch
          %160 = sbr.rel (%p158) target = $region28
        $region27: #{tpu_custom_call.1} parent=23 // pred_region
          %p161 = scmp.lt.s32.totalorder %s13, 1
          %s162 = scalar_select %p161, %s13, 1
          %s163 = scalar_lea.vmem %s0, %s162
        $region28: #{tpu_custom_call.1} parent=23 // pred_fallthru
          _
        // Predicated region
        $region29: #{tpu_custom_call.1} parent=23 // pred_check
          %p164 = pneg %p59
        $region30: #{tpu_custom_call.1} parent=23 // pred_check_branch
          %166 = sbr.rel (%p164) target = $region32
        $region31: #{tpu_custom_call.1} parent=23 // pred_region
          %p167 = scmp.lt.s32.totalorder %s13, 1
          %s168 = scalar_select %p167, %s13, 1
          %s169 = scalar_lea.vmem %s1, %s168
        $region32: #{tpu_custom_call.1} parent=23 // pred_fallthru
          _
      $region24: #{tpu_custom_call.1} parent=5 // pred_fallthru
        _
      %p170 = scmp.le.s32.totalorder 1, %s13
      %p171 = scmp.lt.s32.totalorder %s13, 3
      %p172 = pnand %p170, %p171
      %p173 = pneg %p172
      // Predicated region
      $region33: #{tpu_custom_call.1} parent=5 // pred_check
        _
      $region34: #{tpu_custom_call.1} parent=5 // pred_check_branch
        %175 = sbr.rel (%p172) target = $region36
      $region35: #{tpu_custom_call.1} parent=5 // pred_region
        %s176 = ssub.s32 %s13, 1
        %p177 = scmp.lt.s32.totalorder %s18, 1
        %s178 = scalar_select %p177, %s18, 1
        %s179 = scalar_lea.vmem %s0, %s178
        %p180 = pneg %p39
        %p181 = pneg %p36
        %p182 = scmp.lt.s32.totalorder %s18, 1
        %s183 = scalar_select %p182, %s18, 1
        %s184 = scalar_lea.vmem %s1, %s183
        %p185 = pneg %p65
        %p186 = pneg %p62
        %p187 = pneg %p86
        %p188 = pneg %p83
        %p189 = pneg %p107
        %p190 = pneg %p104
        %p191 = pneg %p133
        %p192 = pneg %p130
        %s193 = sand.u32 %s120, 1
        %s194 = scalar_lea.sflag [#allocation3], %s193
        %s195 = sand.u32 %s120, 1
        %s196 = scalar_lea.vmem [#allocation2], %s195
        %p197 = scmp.lt.s32.totalorder %s18, 1
        %s198 = scalar_select %p197, %s18, 1
        %s199 = scalar_lea.vmem %s0, %s198
        %p200 = scmp.lt.s32.totalorder %s18, 1
        %s201 = scalar_select %p200, %s18, 1
        %s202 = scalar_lea.vmem %s1, %s201
        %v203 = vld [vmem:[%s199] sm:$0x1]
        %v204 = vld [vmem:[%s202] sm:$0x1]
        %v205 = vlaneseq
        %v206 = vshrl.u32 %v205, 7
        %v207 = vadd.s32 %v206, 8
        %v208 = vadd.s32 %v206, 16
        %v209 = vadd.s32 %v206, 24
        %v210 = vadd.s32 %v206, 32
        %v211 = vadd.s32 %v206, 40
        %v212 = vadd.s32 %v206, 48
        %v213 = vadd.s32 %v206, 56
        %v214 = vadd.s32 %v206, 64
        %v215 = vadd.s32 %v206, 72
        %v216 = vadd.s32 %v206, 80
        %v217 = vadd.s32 %v206, 88
        %v218 = vlaneseq
        %v219 = vshrl.u32 %v218, 7
        %v220 = vsub.s32 0, %v219
        %v221 = vrot.slane %v203, %v220
        %vm222 = vcmp.eq.s32.totalorder %v206, %v221
        %vm223 = vcmp.eq.s32.totalorder %v207, %v221
        %vm224 = vcmp.eq.s32.totalorder %v208, %v221
        %vm225 = vcmp.eq.s32.totalorder %v209, %v221
        %vm226 = vcmp.eq.s32.totalorder %v210, %v221
        %vm227 = vcmp.eq.s32.totalorder %v211, %v221
        %vm228 = vcmp.eq.s32.totalorder %v212, %v221
        %vm229 = vcmp.eq.s32.totalorder %v213, %v221
        %vm230 = vcmp.eq.s32.totalorder %v214, %v221
        %vm231 = vcmp.eq.s32.totalorder %v215, %v221
        %vm232 = vcmp.eq.s32.totalorder %v216, %v221
        %vm233 = vcmp.eq.s32.totalorder %v217, %v221
        %v234 = vsel %vm222, 1, 0
        %v235 = vsel %vm223, 1, 0
        %v236 = vsel %vm224, 1, 0
        %v237 = vsel %vm225, 1, 0
        %v238 = vsel %vm226, 1, 0
        %v239 = vsel %vm227, 1, 0
        %v240 = vsel %vm228, 1, 0
        %v241 = vsel %vm229, 1, 0
        %v242 = vsel %vm230, 1, 0
        %v243 = vsel %vm231, 1, 0
        %v244 = vsel %vm232, 1, 0
        %v245 = vsel %vm233, 1, 0
        %v246 = vcvt.s32.f32 %v234
        %v247 = vcvt.s32.f32 %v235
        %v248 = vcvt.s32.f32 %v236
        %v249 = vcvt.s32.f32 %v237
        %v250 = vcvt.s32.f32 %v238
        %v251 = vcvt.s32.f32 %v239
        %v252 = vcvt.s32.f32 %v240
        %v253 = vcvt.s32.f32 %v241
        %v254 = vcvt.s32.f32 %v242
        %v255 = vcvt.s32.f32 %v243
        %v256 = vcvt.s32.f32 %v244
        %v257 = vcvt.s32.f32 %v245
        %v258 = vadd.s32 %v206, 96
        %v259 = vadd.s32 %v206, 104
        %v260 = vadd.s32 %v206, 112
        %v261 = vadd.s32 %v206, 120
        %v262 = vadd.s32 %v206, 128
        %v263 = vadd.s32 %v206, 136
        %v264 = vadd.s32 %v206, 144
        %v265 = vadd.s32 %v206, 152
        %v266 = vlaneseq
        %v267 = vshrl.u32 %v266, 7
        %v268 = vsub.s32 0, %v267
        %v269 = vrot.slane %v204, %v268
        %vm270 = vcmp.eq.s32.totalorder %v206, %v269
        %vm271 = vcmp.eq.s32.totalorder %v207, %v269
        %vm272 = vcmp.eq.s32.totalorder %v208, %v269
        %vm273 = vcmp.eq.s32.totalorder %v209, %v269
        %vm274 = vcmp.eq.s32.totalorder %v210, %v269
        %vm275 = vcmp.eq.s32.totalorder %v211, %v269
        %vm276 = vcmp.eq.s32.totalorder %v212, %v269
        %vm277 = vcmp.eq.s32.totalorder %v213, %v269
        %vm278 = vcmp.eq.s32.totalorder %v214, %v269
        %vm279 = vcmp.eq.s32.totalorder %v215, %v269
        %vm280 = vcmp.eq.s32.totalorder %v216, %v269
        %vm281 = vcmp.eq.s32.totalorder %v217, %v269
        %vm282 = vcmp.eq.s32.totalorder %v258, %v269
        %vm283 = vcmp.eq.s32.totalorder %v259, %v269
        %vm284 = vcmp.eq.s32.totalorder %v260, %v269
        %vm285 = vcmp.eq.s32.totalorder %v261, %v269
        %vm286 = vcmp.eq.s32.totalorder %v262, %v269
        %vm287 = vcmp.eq.s32.totalorder %v263, %v269
        %vm288 = vcmp.eq.s32.totalorder %v264, %v269
        %vm289 = vcmp.eq.s32.totalorder %v265, %v269
        %v290 = vsel %vm270, 1, 0
        %v291 = vsel %vm271, 1, 0
        %v292 = vsel %vm272, 1, 0
        %v293 = vsel %vm273, 1, 0
        %v294 = vsel %vm274, 1, 0
        %v295 = vsel %vm275, 1, 0
        %v296 = vsel %vm276, 1, 0
        %v297 = vsel %vm277, 1, 0
        %v298 = vsel %vm278, 1, 0
        %v299 = vsel %vm279, 1, 0
        %v300 = vsel %vm280, 1, 0
        %v301 = vsel %vm281, 1, 0
        %v302 = vsel %vm282, 1, 0
        %v303 = vsel %vm283, 1, 0
        %v304 = vsel %vm284, 1, 0
        %v305 = vsel %vm285, 1, 0
        %v306 = vsel %vm286, 1, 0
        %v307 = vsel %vm287, 1, 0
        %v308 = vsel %vm288, 1, 0
        %v309 = vsel %vm289, 1, 0
        %v310 = vcvt.s32.f32 %v290
        %v311 = vcvt.s32.f32 %v291
        %v312 = vcvt.s32.f32 %v292
        %v313 = vcvt.s32.f32 %v293
        %v314 = vcvt.s32.f32 %v294
        %v315 = vcvt.s32.f32 %v295
        %v316 = vcvt.s32.f32 %v296
        %v317 = vcvt.s32.f32 %v297
        %v318 = vcvt.s32.f32 %v298
        %v319 = vcvt.s32.f32 %v299
        %v320 = vcvt.s32.f32 %v300
        %v321 = vcvt.s32.f32 %v301
        %v322 = vcvt.s32.f32 %v302
        %v323 = vcvt.s32.f32 %v303
        %v324 = vcvt.s32.f32 %v304
        %v325 = vcvt.s32.f32 %v305
        %v326 = vcvt.s32.f32 %v306
        %v327 = vcvt.s32.f32 %v307
        %v328 = vcvt.s32.f32 %v308
        %v329 = vcvt.s32.f32 %v309
        %v330 = vld [vmem:[%s2] sm:$0xff]
        %v331 = vld [vmem:[%s2 + $0x8] sm:$0xff]
        %v332 = vld [vmem:[%s2 + $0x10] sm:$0xff]
        %v333 = vld [vmem:[%s2 + $0x18] sm:$0xff]
        %v334 = vld [vmem:[%s2 + $0x20] sm:$0xff]
        %v335 = vld [vmem:[%s2 + $0x28] sm:$0xff]
        %v336 = vld [vmem:[%s2 + $0x30] sm:$0xff]
        %v337 = vld [vmem:[%s2 + $0x38] sm:$0xff]
        %v338 = vld [vmem:[%s2 + $0x40] sm:$0xff]
        %v339 = vld [vmem:[%s2 + $0x48] sm:$0xff]
        %v340 = vld [vmem:[%s2 + $0x50] sm:$0xff]
        %v341 = vld [vmem:[%s2 + $0x58] sm:$0xff]
        %342 = vxpose.xlu0.b32.start [1/16] %v330, 128
        %343 = vxpose.xlu0.b32.cont [2/16] %v331, 128
        %344 = vxpose.xlu0.b32.cont [3/16] %v332, 128
        %345 = vxpose.xlu0.b32.cont [4/16] %v333, 128
        %346 = vxpose.xlu0.b32.cont [5/16] %v334, 128
        %347 = vxpose.xlu0.b32.cont [6/16] %v335, 128
        %348 = vxpose.xlu0.b32.cont [7/16] %v336, 128
        %349 = vxpose.xlu0.b32.cont [8/16] %v337, 128
        %350 = vxpose.xlu0.b32.cont [9/16] %v338, 128
        %351 = vxpose.xlu0.b32.cont [10/16] %v339, 128
        %352 = vxpose.xlu0.b32.cont [11/16] %v340, 128
        %353 = vxpose.xlu0.b32.cont [12/16] %v341, 128
        %354 = vxpose.xlu0.b32.cont [13/16] 0.0, 128
        %355 = vxpose.xlu0.b32.cont [14/16] 0.0, 128
        %356 = vxpose.xlu0.b32.cont [15/16] 0.0, 128
        %357 = vxpose.xlu0.b32.end [16/16] 0.0, 128
        %v358 = vpop.trf.xlu0
        %v359 = vpop.trf.xlu0
        %v360 = vpop.trf.xlu0
        %v361 = vpop.trf.xlu0
        %v362 = vpop.trf.xlu0
        %v363 = vpop.trf.xlu0
        %v364 = vpop.trf.xlu0
        %v365 = vpop.trf.xlu0
        %v366 = vpop.trf.xlu0
        %v367 = vpop.trf.xlu0
        %v368 = vpop.trf.xlu0
        %v369 = vpop.trf.xlu0
        %v370 = vpop.trf.xlu0
        %v371 = vpop.trf.xlu0
        %v372 = vpop.trf.xlu0
        %v373 = vpop.trf.xlu0
        %vm374 = vcmask 785408
        %v376 = vsel %vm374, %v358, 0
        %v379 = vsel %vm374, %v359, 0
        %v382 = vsel %vm374, %v360, 0
        %v385 = vsel %vm374, %v361, 0
        %387 = vmatprep.subr.mxu0 0.0
        %388 = vmatpush1.msra.mxu0 0.0
        %389 = vmatprep.subr.mxu0 0.0
        %390 = vmatpush1.msra.mxu0 0.0
        %391 = vmatprep.subr.mxu0 0.0
        %392 = vmatpush1.msra.mxu0 0.0
        %393 = vmatprep.subr.mxu0 0.0
        %394 = vmatpush1.msra.mxu0 0.0
        %395 = vmatprep.subr.mxu0 0.0
        %396 = vmatpush1.msra.mxu0 %v257
        %397 = vmatprep.subr.mxu0 0.0
        %398 = vmatpush1.msra.mxu0 %v256
        %399 = vmatprep.subr.mxu0 0.0
        %400 = vmatpush1.msra.mxu0 %v255
        %401 = vmatprep.subr.mxu0 0.0
        %402 = vmatpush1.msra.mxu0 %v254
        %403 = vmatprep.subr.mxu0 0.0
        %404 = vmatpush1.msra.mxu0 %v253
        %405 = vmatprep.subr.mxu0 0.0
        %406 = vmatpush1.msra.mxu0 %v252
        %407 = vmatprep.subr.mxu0 0.0
        %408 = vmatpush1.msra.mxu0 %v251
        %409 = vmatprep.subr.mxu0 0.0
        %410 = vmatpush1.msra.mxu0 %v250
        %411 = vmatprep.subr.mxu0 0.0
        %412 = vmatpush1.msra.mxu0 %v249
        %413 = vmatprep.subr.mxu0 0.0
        %414 = vmatpush1.msra.mxu0 %v248
        %415 = vmatprep.subr.mxu0 0.0
        %416 = vmatpush1.msra.mxu0 %v247
        %417 = vmatprep.subr.mxu0 0.0
        %418 = vmatpush1.msra.mxu0 %v246
        %419 = vmatprep.subr.mxu0 0.0
        %420 = vmatpush2.msra.mxu0 0.0
        %421 = vmatprep.subr.mxu0 0.0
        %422 = vmatpush2.msra.mxu0 0.0
        %423 = vmatprep.subr.mxu0 0.0
        %424 = vmatpush2.msra.mxu0 0.0
        %425 = vmatprep.subr.mxu0 0.0
        %426 = vmatpush2.msra.mxu0 0.0
        %427 = vmatprep.subr.mxu0 0.0
        %428 = vmatpush2.msra.mxu0 0.0
        %429 = vmatprep.subr.mxu0 0.0
        %430 = vmatpush2.msra.mxu0 0.0
        %431 = vmatprep.subr.mxu0 0.0
        %432 = vmatpush2.msra.mxu0 0.0
        %433 = vmatprep.subr.mxu0 0.0
        %434 = vmatpush2.msra.mxu0 0.0
        %435 = vmatprep.subr.mxu0 0.0
        %436 = vmatpush2.msra.mxu0 0.0
        %437 = vmatprep.subr.mxu0 0.0
        %438 = vmatpush2.msra.mxu0 0.0
        %439 = vmatprep.subr.mxu0 0.0
        %440 = vmatpush2.msra.mxu0 0.0
        %441 = vmatprep.subr.mxu0 0.0
        %442 = vmatpush2.msra.mxu0 0.0
        %443 = vmatprep.subr.mxu0 0.0
        %444 = vmatpush2.msra.mxu0 0.0
        %445 = vmatprep.subr.mxu0 0.0
        %446 = vmatpush2.msra.mxu0 0.0
        %447 = vmatprep.subr.mxu0 0.0
        %448 = vmatpush2.msra.mxu0 0.0
        %449 = vmatprep.subr.mxu0 0.0
        %450 = vmatpush2.msra.mxu0 0.0
        %451 = vmatprep.mubr.f32.mxu0 0.0
        %452 = vmatmul.mubr.f32.gmra.mxu0 %v376
        %v453 = vpop.f32.mrf.mxu0
        %v454 = vadd.f32 0.0, %v453
        %v455 = vpop.f32.mrf.mxu0
        %456 = vmatprep.mubr.f32.mxu0 0.0
        %457 = vmatmul.mubr.f32.gmra.mxu0 %v379
        %v458 = vpop.f32.mrf.mxu0
        %v459 = vadd.f32 0.0, %v458
        %v460 = vpop.f32.mrf.mxu0
        %461 = vmatprep.mubr.f32.mxu0 0.0
        %462 = vmatmul.mubr.f32.gmra.mxu0 %v382
        %v463 = vpop.f32.mrf.mxu0
        %v464 = vadd.f32 0.0, %v463
        %v465 = vpop.f32.mrf.mxu0
        %466 = vmatprep.mubr.f32.mxu0 0.0
        %467 = vmatmul.mubr.f32.gmra.mxu0 %v385
        %v468 = vpop.f32.mrf.mxu0
        %v469 = vadd.f32 0.0, %v468
        %v470 = vpop.f32.mrf.mxu0
        %471 = vdwg.mxu0
        %v472 = vld [vmem:[%s3] sm:$0xff]
        %v473 = vld [vmem:[%s3 + $0x8] sm:$0xff]
        %v474 = vld [vmem:[%s3 + $0x10] sm:$0xff]
        %v475 = vld [vmem:[%s3 + $0x18] sm:$0xff]
        %v476 = vld [vmem:[%s3 + $0x20] sm:$0xff]
        %v477 = vld [vmem:[%s3 + $0x28] sm:$0xff]
        %v478 = vld [vmem:[%s3 + $0x30] sm:$0xff]
        %v479 = vld [vmem:[%s3 + $0x38] sm:$0xff]
        %v480 = vld [vmem:[%s3 + $0x40] sm:$0xff]
        %v481 = vld [vmem:[%s3 + $0x48] sm:$0xff]
        %v482 = vld [vmem:[%s3 + $0x50] sm:$0xff]
        %v483 = vld [vmem:[%s3 + $0x58] sm:$0xff]
        %v484 = vld [vmem:[%s3 + $0x60] sm:$0xff]
        %v485 = vld [vmem:[%s3 + $0x68] sm:$0xff]
        %v486 = vld [vmem:[%s3 + $0x70] sm:$0xff]
        %v487 = vld [vmem:[%s3 + $0x78] sm:$0xff]
        %v488 = vld [vmem:[%s3 + $0x80] sm:$0xff]
        %v489 = vld [vmem:[%s3 + $0x88] sm:$0xff]
        %v490 = vld [vmem:[%s3 + $0x90] sm:$0xff]
        %v491 = vld [vmem:[%s3 + $0x98] sm:$0xff]
        %492 = vxpose.xlu0.b32.start [1/16] %v472, 128
        %493 = vxpose.xlu0.b32.cont [2/16] %v473, 128
        %494 = vxpose.xlu0.b32.cont [3/16] %v474, 128
        %495 = vxpose.xlu0.b32.cont [4/16] %v475, 128
        %496 = vxpose.xlu0.b32.cont [5/16] %v476, 128
        %497 = vxpose.xlu0.b32.cont [6/16] %v477, 128
        %498 = vxpose.xlu0.b32.cont [7/16] %v478, 128
        %499 = vxpose.xlu0.b32.cont [8/16] %v479, 128
        %500 = vxpose.xlu0.b32.cont [9/16] %v480, 128
        %501 = vxpose.xlu0.b32.cont [10/16] %v481, 128
        %502 = vxpose.xlu0.b32.cont [11/16] %v482, 128
        %503 = vxpose.xlu0.b32.cont [12/16] %v483, 128
        %504 = vxpose.xlu0.b32.cont [13/16] %v484, 128
        %505 = vxpose.xlu0.b32.cont [14/16] %v485, 128
        %506 = vxpose.xlu0.b32.cont [15/16] %v486, 128
        %507 = vxpose.xlu0.b32.end [16/16] %v487, 128
        %v508 = vpop.trf.xlu0
        %v509 = vpop.trf.xlu0
        %v510 = vpop.trf.xlu0
        %v511 = vpop.trf.xlu0
        %v512 = vpop.trf.xlu0
        %v513 = vpop.trf.xlu0
        %v514 = vpop.trf.xlu0
        %v515 = vpop.trf.xlu0
        %v516 = vpop.trf.xlu0
        %v517 = vpop.trf.xlu0
        %v518 = vpop.trf.xlu0
        %v519 = vpop.trf.xlu0
        %v520 = vpop.trf.xlu0
        %v521 = vpop.trf.xlu0
        %v522 = vpop.trf.xlu0
        %v523 = vpop.trf.xlu0
        %524 = vxpose.xlu0.b32.start [1/16] %v488, 128
        %525 = vxpose.xlu0.b32.cont [2/16] %v489, 128
        %526 = vxpose.xlu0.b32.cont [3/16] %v490, 128
        %527 = vxpose.xlu0.b32.cont [4/16] %v491, 128
        %528 = vxpose.xlu0.b32.cont [5/16] 0.0, 128
        %529 = vxpose.xlu0.b32.cont [6/16] 0.0, 128
        %530 = vxpose.xlu0.b32.cont [7/16] 0.0, 128
        %531 = vxpose.xlu0.b32.cont [8/16] 0.0, 128
        %532 = vxpose.xlu0.b32.cont [9/16] 0.0, 128
        %533 = vxpose.xlu0.b32.cont [10/16] 0.0, 128
        %534 = vxpose.xlu0.b32.cont [11/16] 0.0, 128
        %535 = vxpose.xlu0.b32.cont [12/16] 0.0, 128
        %536 = vxpose.xlu0.b32.cont [13/16] 0.0, 128
        %537 = vxpose.xlu0.b32.cont [14/16] 0.0, 128
        %538 = vxpose.xlu0.b32.cont [15/16] 0.0, 128
        %539 = vxpose.xlu0.b32.end [16/16] 0.0, 128
        %v540 = vpop.trf.xlu0
        %v541 = vpop.trf.xlu0
        %v542 = vpop.trf.xlu0
        %v543 = vpop.trf.xlu0
        %v544 = vpop.trf.xlu0
        %v545 = vpop.trf.xlu0
        %v546 = vpop.trf.xlu0
        %v547 = vpop.trf.xlu0
        %v548 = vpop.trf.xlu0
        %v549 = vpop.trf.xlu0
        %v550 = vpop.trf.xlu0
        %v551 = vpop.trf.xlu0
        %v552 = vpop.trf.xlu0
        %v553 = vpop.trf.xlu0
        %v554 = vpop.trf.xlu0
        %v555 = vpop.trf.xlu0
        %vm556 = vcmask 261120
        %v558 = vsel %vm556, %v540, 0
        %v561 = vsel %vm556, %v541, 0
        %v564 = vsel %vm556, %v542, 0
        %v567 = vsel %vm556, %v543, 0
        %569 = vmatprep.subr.mxu0 0.0
        %570 = vmatpush1.msra.mxu0 %v325
        %571 = vmatprep.subr.mxu0 0.0
        %572 = vmatpush1.msra.mxu0 %v324
        %573 = vmatprep.subr.mxu0 0.0
        %574 = vmatpush1.msra.mxu0 %v323
        %575 = vmatprep.subr.mxu0 0.0
        %576 = vmatpush1.msra.mxu0 %v322
        %577 = vmatprep.subr.mxu0 0.0
        %578 = vmatpush1.msra.mxu0 %v321
        %579 = vmatprep.subr.mxu0 0.0
        %580 = vmatpush1.msra.mxu0 %v320
        %581 = vmatprep.subr.mxu0 0.0
        %582 = vmatpush1.msra.mxu0 %v319
        %583 = vmatprep.subr.mxu0 0.0
        %584 = vmatpush1.msra.mxu0 %v318
        %585 = vmatprep.subr.mxu0 0.0
        %586 = vmatpush1.msra.mxu0 %v317
        %587 = vmatprep.subr.mxu0 0.0
        %588 = vmatpush1.msra.mxu0 %v316
        %589 = vmatprep.subr.mxu0 0.0
        %590 = vmatpush1.msra.mxu0 %v315
        %591 = vmatprep.subr.mxu0 0.0
        %592 = vmatpush1.msra.mxu0 %v314
        %593 = vmatprep.subr.mxu0 0.0
        %594 = vmatpush1.msra.mxu0 %v313
        %595 = vmatprep.subr.mxu0 0.0
        %596 = vmatpush1.msra.mxu0 %v312
        %597 = vmatprep.subr.mxu0 0.0
        %598 = vmatpush1.msra.mxu0 %v311
        %599 = vmatprep.subr.mxu0 0.0
        %600 = vmatpush1.msra.mxu0 %v310
        %601 = vmatprep.subr.mxu0 0.0
        %602 = vmatpush2.msra.mxu0 0.0
        %603 = vmatprep.subr.mxu0 0.0
        %604 = vmatpush2.msra.mxu0 0.0
        %605 = vmatprep.subr.mxu0 0.0
        %606 = vmatpush2.msra.mxu0 0.0
        %607 = vmatprep.subr.mxu0 0.0
        %608 = vmatpush2.msra.mxu0 0.0
        %609 = vmatprep.subr.mxu0 0.0
        %610 = vmatpush2.msra.mxu0 0.0
        %611 = vmatprep.subr.mxu0 0.0
        %612 = vmatpush2.msra.mxu0 0.0
        %613 = vmatprep.subr.mxu0 0.0
        %614 = vmatpush2.msra.mxu0 0.0
        %615 = vmatprep.subr.mxu0 0.0
        %616 = vmatpush2.msra.mxu0 0.0
        %617 = vmatprep.subr.mxu0 0.0
        %618 = vmatpush2.msra.mxu0 0.0
        %619 = vmatprep.subr.mxu0 0.0
        %620 = vmatpush2.msra.mxu0 0.0
        %621 = vmatprep.subr.mxu0 0.0
        %622 = vmatpush2.msra.mxu0 0.0
        %623 = vmatprep.subr.mxu0 0.0
        %624 = vmatpush2.msra.mxu0 0.0
        %625 = vmatprep.subr.mxu0 0.0
        %626 = vmatpush2.msra.mxu0 %v329
        %627 = vmatprep.subr.mxu0 0.0
        %628 = vmatpush2.msra.mxu0 %v328
        %629 = vmatprep.subr.mxu0 0.0
        %630 = vmatpush2.msra.mxu0 %v327
        %631 = vmatprep.subr.mxu0 0.0
        %632 = vmatpush2.msra.mxu0 %v326
        %633 = vmatprep.mubr.f32.mxu0 %v558
        %634 = vmatmul.mubr.f32.gmra.mxu0 %v508
        %v635 = vpop.f32.mrf.mxu0
        %v636 = vadd.f32 0.0, %v635
        %v637 = vpop.f32.mrf.mxu0
        %638 = vmatprep.mubr.f32.mxu0 %v561
        %639 = vmatmul.mubr.f32.gmra.mxu0 %v509
        %v640 = vpop.f32.mrf.mxu0
        %v641 = vadd.f32 0.0, %v640
        %v642 = vpop.f32.mrf.mxu0
        %643 = vmatprep.mubr.f32.mxu0 %v564
        %644 = vmatmul.mubr.f32.gmra.mxu0 %v510
        %v645 = vpop.f32.mrf.mxu0
        %v646 = vadd.f32 0.0, %v645
        %v647 = vpop.f32.mrf.mxu0
        %648 = vmatprep.mubr.f32.mxu0 %v567
        %649 = vmatmul.mubr.f32.gmra.mxu0 %v511
        %v650 = vpop.f32.mrf.mxu0
        %v651 = vadd.f32 0.0, %v650
        %v652 = vpop.f32.mrf.mxu0
        %653 = vdwg.mxu0
        %v654 = vmul.f32 %v454, %v636
        %v655 = vmul.f32 %v459, %v641
        %v656 = vmul.f32 %v464, %v646
        %v657 = vmul.f32 %v469, %v651
        %v658 = vadd.f32 %v654, %v655
        %v659 = vadd.f32 %v658, %v656
        %v660 = vadd.f32 %v659, %v657
        %v661 = vrot.slane %v660, 4
        %v662 = vadd.f32 %v660, %v661
        %v663 = vrot.slane %v662, 2
        %v664 = vadd.f32 %v662, %v663
        %v665 = vrot.slane %v664, 1
        %v666 = vadd.f32 %v664, %v665
        %667 = vst [vmem:[%s196] sm:$0x1] %v666
        %s668 = sand.u32 %s120, 1
        %s669 = scalar_lea.sflag [#allocation3], %s668
        %s670 = sand.u32 %s120, 1
        %s671 = scalar_lea.vmem [#allocation2], %s670
        // Predicated region
        $region37: #{tpu_custom_call.1} parent=35 // pred_check
          %p672 = pneg %p130
        $region38: #{tpu_custom_call.1} parent=35 // pred_check_branch
          %674 = sbr.rel (%p672) target = $region40
        $region39: #{tpu_custom_call.1} parent=35 // pred_region
          %s676 = ssub.s32 16, 16
          %677 = vsyncadd %s669, %s676
          %s678 = smul.addr %s18, 16
          %s679 = scalar_lea.hbm %s4, %s678
          %s681 = sshll.u32 %s671, 4
          %s682 = int_to_ptr.vmem [resolvable:$true] %s681
          %684 = dma.vmem_to_hbm [thread:$0]  %s682, 16, %s679, %s669
        $region40: #{tpu_custom_call.1} parent=35 // pred_fallthru
          _
      $region36: #{tpu_custom_call.1} parent=5 // pred_fallthru
        _
      %p685 = scmp.le.s32.totalorder 2, %s13
      // Predicated region
      $region41: #{tpu_custom_call.1} parent=5 // pred_check
        %p686 = pneg %p685
      $region42: #{tpu_custom_call.1} parent=5 // pred_check_branch
        %688 = sbr.rel (%p686) target = $region44
      $region43: #{tpu_custom_call.1} parent=5 // pred_region
        %s689 = ssub.s32 %s13, 2
        // Predicated region
        $region45: #{tpu_custom_call.1} parent=43 // pred_check
          %p690 = pneg %p136
        $region46: #{tpu_custom_call.1} parent=43 // pred_check_branch
          %692 = sbr.rel (%p690) target = $region48
        $region47: #{tpu_custom_call.1} parent=43 // pred_region
          %s693 = sand.u32 %s121, 1
          %s694 = scalar_lea.sflag [#allocation3], %s693
          %s695 = sand.u32 %s121, 1
          %s696 = scalar_lea.vmem [#allocation2], %s695
          %697 = dma.done %s694, 16
        $region48: #{tpu_custom_call.1} parent=43 // pred_fallthru
          _
      $region44: #{tpu_custom_call.1} parent=5 // pred_fallthru
        _
    $region6: #{tpu_custom_call.1} parent=1 // loop_footer
      %s17 = sadd.s32 1, %s13
    $region7: #{tpu_custom_call.1} parent=1 // loop_footer_branch
      %12 = sbr.rel target = $region3
    $region8: #{tpu_custom_call.1} parent=1 // loop_exit
      _
    %698 = vsyncpa [#allocation3], 1
    %s699 = scalar_lea.sflag [#allocation3], 1
    %700 = vsyncpa %s699, 1

</llo_original>
